<compile_context>
chip_gen: v7x
topology: tpu7x:2x2x1
jax: 0.10.0
libtpu: 0.0.40
codegen_flags: <defaults>
</compile_context>

<pallas_src>
import functools

import jax
import jax.numpy as jnp
from jax.experimental import pallas as pl
from jax.experimental.pallas import tpu as pltpu

_LANE = 128
_SUBLANE = 8


def _round_up(x, m):
    return (x + m - 1) // m * m


def _pick_hidden_tile(h_p, target):
    """Largest multiple of 128 that divides h_p and is <= max(target, 128)."""
    th = max(_LANE, min(int(target), h_p))
    th = (th // _LANE) * _LANE
    while h_p % th:
        th -= _LANE
    return th


def _vmem_capacity_bytes():
    # Chip-aware VMEM capacity; conservative 64 MiB fallback (v7x per-TC VMEM).
    try:
        return int(pltpu.get_tpu_info().vmem_capacity_bytes)
    except Exception:
        return 64 * 2**20


def _mlp_kernel(x_ref, w1_ref, b1_ref, w2_ref, b2_ref, o_ref, acc_ref):
    j = pl.program_id(1)

    @pl.when(j == 0)
    def _():
        acc_ref[...] = jnp.zeros_like(acc_ref)

    # fc1 on this hidden slice: (tm, Cin) @ (Cin, TH), f32 accumulation.
    h = jnp.dot(x_ref[...], w1_ref[...], preferred_element_type=jnp.float32)
    h = h + b1_ref[...]  # bias kept in f32
    # Exact (erf-based) GELU in f32, matching torch.nn.GELU default.
    h = 0.5 * h * (1.0 + jax.lax.erf(h * jnp.float32(0.7071067811865476)))
    # fc2 partial product: (tm, TH) @ (TH, Cout), accumulated in f32.
    acc_ref[...] += jnp.dot(h.astype(w2_ref.dtype), w2_ref[...],
                            preferred_element_type=jnp.float32)

    @pl.when(j == pl.num_programs(1) - 1)
    def _():
        o_ref[...] = (acc_ref[...] + b2_ref[...]).astype(o_ref.dtype)


@functools.partial(
    jax.jit,
    static_argnames=("tile_m", "tile_h", "compute_dtype", "out_dtype"))
def _mlp_pallas_impl(x, w1, b1, w2, b2, *, tile_m, tile_h, compute_dtype,
                     out_dtype):
    out_dtype = jnp.dtype(out_dtype) if out_dtype is not None else x.dtype
    compute_dtype = jnp.dtype(compute_dtype)

    # MXU inputs in compute_dtype (bf16 by default); accumulation / bias / GELU
    # stay in f32 inside the kernel.
    x = x.astype(compute_dtype)
    w1 = w1.astype(compute_dtype)
    w2 = w2.astype(compute_dtype)
    b1 = b1.astype(jnp.float32)
    b2 = b2.astype(jnp.float32)

    B, N, C_in = x.shape
    assert w1.shape[0] == C_in
    hidden = w1.shape[1]
    assert b1.shape == (hidden,)
    assert w2.shape[0] == hidden
    C_out = w2.shape[1]
    assert b2.shape == (C_out,)
    M = B * N

    # Lane-dense feature dims: pad to multiples of 128 so every load/store is a
    # full, unmasked vector.  Zero padding is exact: padded hidden columns give
    # h=0, GELU(0)=0, and padded w2 rows/cols are zero.
    C_in_p = _round_up(C_in, _LANE)
    H_p = _round_up(hidden, _LANE)
    C_out_p = _round_up(C_out, _LANE)

    # Row tile (sublane aligned, clamped for tiny inputs) and hidden tile
    # (multiple of 128 dividing H_p).
    tm = max(_SUBLANE, min(_round_up(tile_m, _SUBLANE), _round_up(M, _SUBLANE)))
    TH = _pick_hidden_tile(H_p, tile_h)

    w_isz = compute_dtype.itemsize
    o_isz = out_dtype.itemsize

    def footprint(tm_, th_):
        return (2 * tm_ * C_in_p * w_isz            # x tile, double-buffered
                + 2 * tm_ * C_out_p * o_isz          # out tile, double-buffered
                + 2 * (C_in_p * th_ + th_ * C_out_p) * w_isz  # streamed w1/w2
                + 2 * (th_ + C_out_p) * 4            # bias blocks (f32)
                + tm_ * C_out_p * 4                  # f32 accumulator scratch
                + 2 * tm_ * th_ * 4)                 # f32 hidden/GELU temporaries

    cap = int(0.9 * _vmem_capacity_bytes())
    # Shrink tiles until the footprint fits the chip's VMEM budget.
    while footprint(tm, TH) > cap and (tm > 128 or TH > _LANE):
        if tm > 128 and tm >= TH:
            tm = max(128, _round_up(tm // 2, _SUBLANE))
        else:
            TH = _pick_hidden_tile(H_p, TH // 2)

    M_p = _round_up(M, tm)

    # Only materialize pads when dims are actually unaligned (zero cost for the
    # common 128-aligned transformer dims).
    x2 = x.reshape(M, C_in)
    if (M_p, C_in_p) != (M, C_in):
        x2 = jnp.pad(x2, ((0, M_p - M), (0, C_in_p - C_in)))
    w1p = w1 if (C_in_p, H_p) == (C_in, hidden) else jnp.pad(
        w1, ((0, C_in_p - C_in), (0, H_p - hidden)))
    w2p = w2 if (H_p, C_out_p) == (hidden, C_out) else jnp.pad(
        w2, ((0, H_p - hidden), (0, C_out_p - C_out)))
    b1p = (b1 if H_p == hidden else jnp.pad(b1, (0, H_p - hidden))).reshape(1, H_p)
    b2p = (b2 if C_out_p == C_out else jnp.pad(b2, (0, C_out_p - C_out))
           ).reshape(1, C_out_p)

    vmem_limit = int(min(max(int(1.5 * footprint(tm, TH)), 32 * 2**20), cap))

    grid = (M_p // tm, H_p // TH)

    out2 = pl.pallas_call(
        _mlp_kernel,
        out_shape=jax.ShapeDtypeStruct((M_p, C_out_p), out_dtype),
        grid_spec=pltpu.PrefetchScalarGridSpec(
            num_scalar_prefetch=0,
            grid=grid,
            in_specs=[
                # x tile: constant over the hidden axis (fetched once per row tile).
                pl.BlockSpec((tm, C_in_p), lambda i, j: (i, 0)),
                # Streamed weight / bias slices along the hidden axis.
                pl.BlockSpec((C_in_p, TH), lambda i, j: (0, j)),
                pl.BlockSpec((1, TH), lambda i, j: (0, j)),
                pl.BlockSpec((TH, C_out_p), lambda i, j: (j, 0)),
                pl.BlockSpec((1, C_out_p), lambda i, j: (0, 0)),
            ],
            out_specs=pl.BlockSpec((tm, C_out_p), lambda i, j: (i, 0)),
            scratch_shapes=[pltpu.VMEM((tm, C_out_p), jnp.float32)],
        ),
        compiler_params=pltpu.CompilerParams(
            dimension_semantics=("parallel", "arbitrary"),
            vmem_limit_bytes=vmem_limit,
        ),
    )(x2, w1p, b1p, w2p, b2p)

    out = out2
    if (M_p, C_out_p) != (M, C_out):
        out = out2[:M, :C_out]
    return out.reshape(B, N, C_out)


def mlp_pallas(x, w1, b1, w2, b2, *, tile_m=512, tile_h=512,
               compute_dtype=jnp.bfloat16, out_dtype=None):
    """Mlp forward (fc1 -> exact GELU -> fc2); dropout omitted (drop=0.0).

    x: (B, N, C_in); w1: (C_in, hidden); b1: (hidden,); w2: (hidden, C_out);
    b2: (C_out,).  Weights are (in, out), i.e. transposed vs torch nn.Linear.
    compute_dtype sets the MXU input dtype (bf16 default; accumulation, bias
    and GELU are always f32).  Pass compute_dtype=jnp.float32 for strict parity.
    out_dtype optionally narrows the output (default: x.dtype).
    """
    return _mlp_pallas_impl(
        x, w1, b1, w2, b2, tile_m=tile_m, tile_h=tile_h,
        compute_dtype=compute_dtype, out_dtype=out_dtype)


def mlp_reference(x, w1, b1, w2, b2):
    h = jnp.einsum("bnc,ch->bnh", x, w1) + b1
    h = 0.5 * h * (1.0 + jax.lax.erf(h / jnp.sqrt(2.0)))
    return jnp.einsum("bnh,ho->bno", h, w2) + b2


if __name__ == "__main__":
    # Small shapes: batch=2, seq=8, in_features=32, hidden_features=64, out=32
    B, N = 2, 8
    in_features, hidden_features, out_features = 32, 64, 32

    key = jax.random.PRNGKey(0)
    kx, kw1, kb1, kw2, kb2 = jax.random.split(key, 5)

    x = jax.random.normal(kx, (B, N, in_features), dtype=jnp.float32)
    # nn.Linear stores weight as (out, in); we keep the transposed (in, out) layout.
    w1 = jax.random.normal(kw1, (in_features, hidden_features), dtype=jnp.float32) * 0.02
    b1 = jax.random.normal(kb1, (hidden_features,), dtype=jnp.float32) * 0.02
    w2 = jax.random.normal(kw2, (hidden_features, out_features), dtype=jnp.float32) * 0.02
    b2 = jax.random.normal(kb2, (out_features,), dtype=jnp.float32) * 0.02

    ref = mlp_reference(x, w1, b1, w2, b2)

    # Strict-parity path: f32 MXU inputs -> exact match with the reference.
    out_f32 = mlp_pallas(x, w1, b1, w2, b2, compute_dtype=jnp.float32)
    out_f32 = jax.block_until_ready(out_f32)
    assert out_f32.shape == (B, N, out_features)
    assert jnp.allclose(out_f32, ref, atol=1e-5, rtol=1e-5), "mismatch vs f32 reference"

    # Default path: bf16 MXU inputs, f32 accumulation / bias / GELU.
    out_bf16 = mlp_pallas(x, w1, b1, w2, b2)
    out_bf16 = jax.block_until_ready(out_bf16)
    assert out_bf16.shape == (B, N, out_features)
    assert bool(jnp.all(jnp.isfinite(out_bf16)))
    assert float(jnp.max(jnp.abs(out_bf16.astype(jnp.float32) - ref))) < 5e-2

    print("KERNEL_OK")
</pallas_src>

<mosaic_0001>
module attributes {stable_mosaic.version = 11 : i64} {
  func.func @_mlp_kernel(%arg0: i32, %arg1: i32, %arg2: memref<16x128xf32, #tpu.memory_space<vmem>>, %arg3: memref<128x128xf32, #tpu.memory_space<vmem>>, %arg4: memref<1x128xf32, #tpu.memory_space<vmem>>, %arg5: memref<128x128xf32, #tpu.memory_space<vmem>>, %arg6: memref<1x128xf32, #tpu.memory_space<vmem>>, %arg7: memref<16x128xf32, #tpu.memory_space<vmem>>, %arg8: memref<16x128xf32, #tpu.memory_space<vmem>>) attributes {dimension_semantics = [#tpu.dimension_semantics<parallel>, #tpu.dimension_semantics<arbitrary>], iteration_bounds = array<i64: 1, 1>, scalar_prefetch = 0 : i64, scratch_operands = 1 : i64, tpu.core_type = #tpu.core_type<tc>, window_params = [{transform_indices = @transform_0, window_bounds = array<i64: 16, 128>}, {transform_indices = @transform_1, window_bounds = array<i64: 128, 128>}, {transform_indices = @transform_2, window_bounds = array<i64: 1, 128>}, {transform_indices = @transform_3, window_bounds = array<i64: 128, 128>}, {pipeline_mode = #tpu.pipeline_mode<synchronous>, transform_indices = @transform_4, window_bounds = array<i64: 1, 128>}, {transform_indices = @transform_5, window_bounds = array<i64: 16, 128>}]} {
    %c0_i32 = arith.constant 0 : i32
    %0 = arith.cmpi eq, %arg1, %c0_i32 : i32
    %1 = arith.extui %0 : i1 to i32
    %c0_i32_0 = arith.constant 0 : i32
    %2 = arith.cmpi ne, %1, %c0_i32_0 : i32
    scf.if %2 {
      %cst_18 = arith.constant 0.000000e+00 : f32
      %25 = vector.broadcast %cst_18 : f32 to vector<16x128xf32>
      %c0_19 = arith.constant 0 : index
      %c0_20 = arith.constant 0 : index
      %26 = vector.load %arg8[%c0_19, %c0_20] : memref<16x128xf32, #tpu.memory_space<vmem>>, vector<16x128xf32>
      tpu.vector_store %arg8[%c0_19, %c0_20], %25 {strides = array<i32>} : memref<16x128xf32, #tpu.memory_space<vmem>>, vector<16x128xf32>,
    } else {
    }
    %c0 = arith.constant 0 : index
    %c0_1 = arith.constant 0 : index
    %3 = vector.load %arg2[%c0, %c0_1] : memref<16x128xf32, #tpu.memory_space<vmem>>, vector<16x128xf32>
    %c0_2 = arith.constant 0 : index
    %c0_3 = arith.constant 0 : index
    %4 = vector.load %arg3[%c0_2, %c0_3] : memref<128x128xf32, #tpu.memory_space<vmem>>, vector<128x128xf32>
    %cst = arith.constant dense<0.000000e+00> : vector<16x128xf32>
    %5 = tpu.matmul %3, %4, %cst {dimension_numbers = #tpu.dot_dimension_numbers<[1], [0], [0], [1], [0, 0, 1, 1], [], []>} : vector<16x128xf32>, vector<128x128xf32>, vector<16x128xf32> -> vector<16x128xf32>
    %c0_4 = arith.constant 0 : index
    %c0_5 = arith.constant 0 : index
    %6 = vector.load %arg4[%c0_4, %c0_5] : memref<1x128xf32, #tpu.memory_space<vmem>>, vector<1x128xf32>
    %7 = vector.broadcast %6 : vector<1x128xf32> to vector<16x128xf32>
    %8 = arith.addf %5, %7 : vector<16x128xf32>
    %cst_6 = arith.constant 5.000000e-01 : f32
    %9 = vector.broadcast %cst_6 : f32 to vector<16x128xf32>
    %10 = arith.mulf %9, %8 : vector<16x128xf32>
    %cst_7 = arith.constant 0.707106769 : f32
    %11 = vector.broadcast %cst_7 : f32 to vector<16x128xf32>
    %12 = arith.mulf %8, %11 : vector<16x128xf32>
    %13 = math.erf %12 : vector<16x128xf32>
    %cst_8 = arith.constant 1.000000e+00 : f32
    %14 = vector.broadcast %cst_8 : f32 to vector<16x128xf32>
    %15 = arith.addf %14, %13 : vector<16x128xf32>
    %16 = arith.mulf %10, %15 : vector<16x128xf32>
    %c0_9 = arith.constant 0 : index
    %c0_10 = arith.constant 0 : index
    %17 = vector.load %arg8[%c0_9, %c0_10] : memref<16x128xf32, #tpu.memory_space<vmem>>, vector<16x128xf32>
    %c0_11 = arith.constant 0 : index
    %c0_12 = arith.constant 0 : index
    %18 = vector.load %arg5[%c0_11, %c0_12] : memref<128x128xf32, #tpu.memory_space<vmem>>, vector<128x128xf32>
    %cst_13 = arith.constant dense<0.000000e+00> : vector<16x128xf32>
    %19 = tpu.matmul %16, %18, %cst_13 {dimension_numbers = #tpu.dot_dimension_numbers<[1], [0], [0], [1], [0, 0, 1, 1], [], []>} : vector<16x128xf32>, vector<128x128xf32>, vector<16x128xf32> -> vector<16x128xf32>
    %20 = arith.addf %17, %19 : vector<16x128xf32>
    %c0_14 = arith.constant 0 : index
    %c0_15 = arith.constant 0 : index
    %21 = vector.load %arg8[%c0_14, %c0_15] : memref<16x128xf32, #tpu.memory_space<vmem>>, vector<16x128xf32>
    tpu.vector_store %arg8[%c0_14, %c0_15], %20 {strides = array<i32>} : memref<16x128xf32, #tpu.memory_space<vmem>>, vector<16x128xf32>,
    %c0_i32_16 = arith.constant 0 : i32
    %22 = arith.cmpi eq, %arg1, %c0_i32_16 : i32
    %23 = arith.extui %22 : i1 to i32
    %c0_i32_17 = arith.constant 0 : i32
    %24 = arith.cmpi ne, %23, %c0_i32_17 : i32
    scf.if %24 {
      %c0_18 = arith.constant 0 : index
      %c0_19 = arith.constant 0 : index
      %25 = vector.load %arg8[%c0_18, %c0_19] : memref<16x128xf32, #tpu.memory_space<vmem>>, vector<16x128xf32>
      %c0_20 = arith.constant 0 : index
      %c0_21 = arith.constant 0 : index
      %26 = vector.load %arg6[%c0_20, %c0_21] : memref<1x128xf32, #tpu.memory_space<vmem>>, vector<1x128xf32>
      %27 = vector.broadcast %26 : vector<1x128xf32> to vector<16x128xf32>
      %28 = arith.addf %25, %27 : vector<16x128xf32>
      %c0_22 = arith.constant 0 : index
      %c0_23 = arith.constant 0 : index
      %29 = vector.load %arg7[%c0_22, %c0_23] : memref<16x128xf32, #tpu.memory_space<vmem>>, vector<16x128xf32>
      tpu.vector_store %arg7[%c0_22, %c0_23], %28 {strides = array<i32>} : memref<16x128xf32, #tpu.memory_space<vmem>>, vector<16x128xf32>,
    } else {
    }
    return
  }
  func.func @transform_0(%arg0: i32, %arg1: i32) -> (i32, i32) {
    %c0_i32 = arith.constant 0 : i32
    %c0_i32_0 = arith.constant 0 : i32
    return %arg0, %c0_i32 : i32, i32
  }
  func.func @transform_1(%arg0: i32, %arg1: i32) -> (i32, i32) {
    %c0_i32 = arith.constant 0 : i32
    %c0_i32_0 = arith.constant 0 : i32
    return %c0_i32, %arg1 : i32, i32
  }
  func.func @transform_2(%arg0: i32, %arg1: i32) -> (i32, i32) {
    %c0_i32 = arith.constant 0 : i32
    %c0_i32_0 = arith.constant 0 : i32
    return %c0_i32, %arg1 : i32, i32
  }
  func.func @transform_3(%arg0: i32, %arg1: i32) -> (i32, i32) {
    %c0_i32 = arith.constant 0 : i32
    %c0_i32_0 = arith.constant 0 : i32
    return %arg1, %c0_i32 : i32, i32
  }
  func.func @transform_4(%arg0: i32, %arg1: i32) -> (i32, i32) {
    %c0_i32 = arith.constant 0 : i32
    %c0_i32_0 = arith.constant 0 : i32
    %c0_i32_1 = arith.constant 0 : i32
    return %c0_i32, %c0_i32_0 : i32, i32
  }
  func.func @transform_5(%arg0: i32, %arg1: i32) -> (i32, i32) {
    %c0_i32 = arith.constant 0 : i32
    %c0_i32_0 = arith.constant 0 : i32
    return %arg0, %c0_i32 : i32, i32
  }
}

</mosaic_0001>

<llo_original>
// kernel: _mlp_pallas_impl.1
$region0: #{_mlp_pallas_impl.1}
  #allocation0 [shape = 'u32[]', space=smem, size = 0x4, offset = 0x4, fixed_abs, tag = 'smem constant byte address 0x4 - core index']
  #allocation1 [shape = 'u32[144,128]{1,0:T(1,128)}', space=vmem, size = 0x12000, scoped, tag = 'internal scratch']
  #allocation2 [shape = 'f32[16,128]{1,0:T(8,128)}', space=vmem, size = 0x2000, scoped, tag = 'scratch operand']
  %s0 = inlined_call_operand.vmem [shape: f32[16,128], index: 0, kind: input, shape index: {}]
  %s1 = inlined_call_operand.vmem [shape: f32[128,128], index: 1, kind: input, shape index: {}]
  %s2 = inlined_call_operand.vmem [shape: f32[1,128], index: 2, kind: input, shape index: {}]
  %s3 = inlined_call_operand.vmem [shape: f32[128,128], index: 3, kind: input, shape index: {}]
  %s4 = inlined_call_operand.vmem [shape: f32[1,128], index: 4, kind: input, shape index: {}]
  %s5 = inlined_call_operand.vmem [shape: f32[16,128], index: 5, kind: output, shape index: {}]
  %s6 = sld [smem:[#allocation0]]
  $region38: #{_mlp_pallas_impl.1} parent=0
    _
  %s8 = ssub.s32 1, %s6
  %s9 = scalar_select 0, %s8, %s6
  // Predicated region
  $region2: #{_mlp_pallas_impl.1} parent=0 // pred_check
    _
  $region3: #{_mlp_pallas_impl.1} parent=0 // pred_check_branch
    %11 = sbr.rel (0) target = $region5
  $region4: #{_mlp_pallas_impl.1} parent=0 // pred_region
    _
  $region5: #{_mlp_pallas_impl.1} parent=0 // pred_fallthru
    _
  // Predicated region
  $region6: #{_mlp_pallas_impl.1} parent=0 // pred_check
    _
  $region7: #{_mlp_pallas_impl.1} parent=0 // pred_check_branch
    %13 = sbr.rel (0) target = $region9
  $region8: #{_mlp_pallas_impl.1} parent=0 // pred_region
    _
  $region9: #{_mlp_pallas_impl.1} parent=0 // pred_fallthru
    _
  // Predicated region
  $region10: #{_mlp_pallas_impl.1} parent=0 // pred_check
    _
  $region11: #{_mlp_pallas_impl.1} parent=0 // pred_check_branch
    %15 = sbr.rel (0) target = $region13
  $region12: #{_mlp_pallas_impl.1} parent=0 // pred_region
    _
  $region13: #{_mlp_pallas_impl.1} parent=0 // pred_fallthru
    _
  // Predicated region
  $region14: #{_mlp_pallas_impl.1} parent=0 // pred_check
    _
  $region15: #{_mlp_pallas_impl.1} parent=0 // pred_check_branch
    %17 = sbr.rel (0) target = $region17
  $region16: #{_mlp_pallas_impl.1} parent=0 // pred_region
    _
  $region17: #{_mlp_pallas_impl.1} parent=0 // pred_fallthru
    _
  // Predicated region
  $region18: #{_mlp_pallas_impl.1} parent=0 // pred_check
    _
  $region19: #{_mlp_pallas_impl.1} parent=0 // pred_check_branch
    %19 = sbr.rel (0) target = $region21
  $region20: #{_mlp_pallas_impl.1} parent=0 // pred_region
    _
  $region21: #{_mlp_pallas_impl.1} parent=0 // pred_fallthru
    _
  %p20 = scmp.eq.s32.totalorder 0, 0
  // Predicated region
  $region22: #{_mlp_pallas_impl.1} parent=0 // pred_check
    %p21 = pneg %p20
  $region23: #{_mlp_pallas_impl.1} parent=0 // pred_check_branch
    %23 = sbr.rel (%p21) target = $region25
  $region24: #{_mlp_pallas_impl.1} parent=0 // pred_region
    %24 = vst [vmem:[#allocation2] sm:$0xff] 0.0
    %25 = vst [vmem:[#allocation2 + $0x8] sm:$0xff] 0.0
  $region25: #{_mlp_pallas_impl.1} parent=0 // pred_fallthru
    _
  %v26 = vld [vmem:[%s0] sm:$0xff]
  %v27 = vld [vmem:[%s0 + $0x8] sm:$0xff]
  %v28 = vld [vmem:[%s1] sm:$0xff]
  %v29 = vld [vmem:[%s1 + $0x8] sm:$0xff]
  %v30 = vld [vmem:[%s1 + $0x10] sm:$0xff]
  %v31 = vld [vmem:[%s1 + $0x18] sm:$0xff]
  %v32 = vld [vmem:[%s1 + $0x20] sm:$0xff]
  %v33 = vld [vmem:[%s1 + $0x28] sm:$0xff]
  %v34 = vld [vmem:[%s1 + $0x30] sm:$0xff]
  %v35 = vld [vmem:[%s1 + $0x38] sm:$0xff]
  %v36 = vld [vmem:[%s1 + $0x40] sm:$0xff]
  %v37 = vld [vmem:[%s1 + $0x48] sm:$0xff]
  %v38 = vld [vmem:[%s1 + $0x50] sm:$0xff]
  %v39 = vld [vmem:[%s1 + $0x58] sm:$0xff]
  %v40 = vld [vmem:[%s1 + $0x60] sm:$0xff]
  %v41 = vld [vmem:[%s1 + $0x68] sm:$0xff]
  %v42 = vld [vmem:[%s1 + $0x70] sm:$0xff]
  %v43 = vld [vmem:[%s1 + $0x78] sm:$0xff]
  %v44 = vld [vmem:[%s2] sm:$0x1]
  %v46 = vlaneseq
  %v47 = vshrl.u32 %v46, 7
  %v48 = vsub.s32 0, %v47
  %v49 = vrot.slane %v44, %v48
  %51 = vmatprep.subr.mxu0 0.0
  %52 = vmatpush1.msra.mxu0 %v28
  %53 = vmatprep.subr.mxu0 0.0
  %54 = vmatpush1.msra.mxu0 %v29
  %55 = vmatprep.subr.mxu0 0.0
  %56 = vmatpush1.msra.mxu0 %v30
  %57 = vmatprep.subr.mxu0 0.0
  %58 = vmatpush1.msra.mxu0 %v31
  %59 = vmatprep.subr.mxu0 0.0
  %60 = vmatpush1.msra.mxu0 %v32
  %61 = vmatprep.subr.mxu0 0.0
  %62 = vmatpush1.msra.mxu0 %v33
  %63 = vmatprep.subr.mxu0 0.0
  %64 = vmatpush1.msra.mxu0 %v34
  %65 = vmatprep.subr.mxu0 0.0
  %66 = vmatpush1.msra.mxu0 %v35
  %67 = vmatprep.subr.mxu0 0.0
  %68 = vmatpush1.msra.mxu0 %v36
  %69 = vmatprep.subr.mxu0 0.0
  %70 = vmatpush1.msra.mxu0 %v37
  %71 = vmatprep.subr.mxu0 0.0
  %72 = vmatpush1.msra.mxu0 %v38
  %73 = vmatprep.subr.mxu0 0.0
  %74 = vmatpush1.msra.mxu0 %v39
  %75 = vmatprep.subr.mxu0 0.0
  %76 = vmatpush1.msra.mxu0 %v40
  %77 = vmatprep.subr.mxu0 0.0
  %78 = vmatpush1.msra.mxu0 %v41
  %79 = vmatprep.subr.mxu0 0.0
  %80 = vmatpush1.msra.mxu0 %v42
  %81 = vmatprep.subr.mxu0 0.0
  %82 = vmatpush1.msra.mxu0 %v43
  %83 = vmatprep.subr.mxu0 0.0
  %84 = vmatpush1.msra.mxu0 0.0
  %85 = vmatprep.subr.mxu0 0.0
  %86 = vmatpush1.msra.mxu0 0.0
  %87 = vmatprep.subr.mxu0 0.0
  %88 = vmatpush1.msra.mxu0 0.0
  %89 = vmatprep.subr.mxu0 0.0
  %90 = vmatpush1.msra.mxu0 0.0
  %91 = vmatprep.subr.mxu0 0.0
  %92 = vmatpush1.msra.mxu0 0.0
  %93 = vmatprep.subr.mxu0 0.0
  %94 = vmatpush1.msra.mxu0 0.0
  %95 = vmatprep.subr.mxu0 0.0
  %96 = vmatpush1.msra.mxu0 0.0
  %97 = vmatprep.subr.mxu0 0.0
  %98 = vmatpush1.msra.mxu0 0.0
  %99 = vmatprep.subr.mxu0 0.0
  %100 = vmatpush1.msra.mxu0 0.0
  %101 = vmatprep.subr.mxu0 0.0
  %102 = vmatpush1.msra.mxu0 0.0
  %103 = vmatprep.subr.mxu0 0.0
  %104 = vmatpush1.msra.mxu0 0.0
  %105 = vmatprep.subr.mxu0 0.0
  %106 = vmatpush1.msra.mxu0 0.0
  %107 = vmatprep.subr.mxu0 0.0
  %108 = vmatpush1.msra.mxu0 0.0
  %109 = vmatprep.subr.mxu0 0.0
  %110 = vmatpush1.msra.mxu0 0.0
  %111 = vmatprep.subr.mxu0 0.0
  %112 = vmatpush1.msra.mxu0 0.0
  %113 = vmatprep.subr.mxu0 0.0
  %114 = vmatpush1.msra.mxu0 0.0
  %115 = vmatprep.mubr.f32.mxu0 0.0
  %116 = vmatmul.mubr.f32.gmra.mrb[0].mxu0 %v26
  %v117 = vpop.f32.mrb[0].mxu0
  %v118 = vadd.f32 %v49, %v117
  %v119 = vpop.f32.mrb[0].mxu0
  %120 = vmatprep.mubr.f32.mxu0 0.0
  %121 = vmatmul.mubr.f32.gmra.mrb[0].mxu0 %v27
  %v122 = vpop.f32.mrb[0].mxu0
  %v123 = vadd.f32 %v49, %v122
  %v124 = vpop.f32.mrb[0].mxu0
  %125 = vdwg.mxu0
  %v126 = vmul.f32 %v118, 0.5
  %v127 = vmul.f32 %v123, 0.5
  %v128 = vmul.f32 %v118, 0.70710677
  %v129 = vmul.f32 %v123, 0.70710677
  %v130 = verf.f32.pop %v128
  %v131 = verf.f32.pop %v129
  %v132 = vadd.f32 %v130, 1.0
  %v133 = vadd.f32 %v131, 1.0
  %v134 = vmul.f32 %v126, %v132
  %v135 = vmul.f32 %v127, %v133
  %v136 = vld [vmem:[#allocation2] sm:$0xff]
  %v137 = vld [vmem:[#allocation2 + $0x8] sm:$0xff]
  %v138 = vld [vmem:[%s3] sm:$0xff]
  %v139 = vld [vmem:[%s3 + $0x8] sm:$0xff]
  %v140 = vld [vmem:[%s3 + $0x10] sm:$0xff]
  %v141 = vld [vmem:[%s3 + $0x18] sm:$0xff]
  %v142 = vld [vmem:[%s3 + $0x20] sm:$0xff]
  %v143 = vld [vmem:[%s3 + $0x28] sm:$0xff]
  %v144 = vld [vmem:[%s3 + $0x30] sm:$0xff]
  %v145 = vld [vmem:[%s3 + $0x38] sm:$0xff]
  %v146 = vld [vmem:[%s3 + $0x40] sm:$0xff]
  %v147 = vld [vmem:[%s3 + $0x48] sm:$0xff]
  %v148 = vld [vmem:[%s3 + $0x50] sm:$0xff]
  %v149 = vld [vmem:[%s3 + $0x58] sm:$0xff]
  %v150 = vld [vmem:[%s3 + $0x60] sm:$0xff]
  %v151 = vld [vmem:[%s3 + $0x68] sm:$0xff]
  %v152 = vld [vmem:[%s3 + $0x70] sm:$0xff]
  %v153 = vld [vmem:[%s3 + $0x78] sm:$0xff]
  %154 = vmatprep.subr.mxu0 0.0
  %155 = vmatpush1.msra.mxu0 %v138
  %156 = vmatprep.subr.mxu0 0.0
  %157 = vmatpush1.msra.mxu0 %v139
  %158 = vmatprep.subr.mxu0 0.0
  %159 = vmatpush1.msra.mxu0 %v140
  %160 = vmatprep.subr.mxu0 0.0
  %161 = vmatpush1.msra.mxu0 %v141
  %162 = vmatprep.subr.mxu0 0.0
  %163 = vmatpush1.msra.mxu0 %v142
  %164 = vmatprep.subr.mxu0 0.0
  %165 = vmatpush1.msra.mxu0 %v143
  %166 = vmatprep.subr.mxu0 0.0
  %167 = vmatpush1.msra.mxu0 %v144
  %168 = vmatprep.subr.mxu0 0.0
  %169 = vmatpush1.msra.mxu0 %v145
  %170 = vmatprep.subr.mxu0 0.0
  %171 = vmatpush1.msra.mxu0 %v146
  %172 = vmatprep.subr.mxu0 0.0
  %173 = vmatpush1.msra.mxu0 %v147
  %174 = vmatprep.subr.mxu0 0.0
  %175 = vmatpush1.msra.mxu0 %v148
  %176 = vmatprep.subr.mxu0 0.0
  %177 = vmatpush1.msra.mxu0 %v149
  %178 = vmatprep.subr.mxu0 0.0
  %179 = vmatpush1.msra.mxu0 %v150
  %180 = vmatprep.subr.mxu0 0.0
  %181 = vmatpush1.msra.mxu0 %v151
  %182 = vmatprep.subr.mxu0 0.0
  %183 = vmatpush1.msra.mxu0 %v152
  %184 = vmatprep.subr.mxu0 0.0
  %185 = vmatpush1.msra.mxu0 %v153
  %186 = vmatprep.subr.mxu0 0.0
  %187 = vmatpush1.msra.mxu0 0.0
  %188 = vmatprep.subr.mxu0 0.0
  %189 = vmatpush1.msra.mxu0 0.0
  %190 = vmatprep.subr.mxu0 0.0
  %191 = vmatpush1.msra.mxu0 0.0
  %192 = vmatprep.subr.mxu0 0.0
  %193 = vmatpush1.msra.mxu0 0.0
  %194 = vmatprep.subr.mxu0 0.0
  %195 = vmatpush1.msra.mxu0 0.0
  %196 = vmatprep.subr.mxu0 0.0
  %197 = vmatpush1.msra.mxu0 0.0
  %198 = vmatprep.subr.mxu0 0.0
  %199 = vmatpush1.msra.mxu0 0.0
  %200 = vmatprep.subr.mxu0 0.0
  %201 = vmatpush1.msra.mxu0 0.0
  %202 = vmatprep.subr.mxu0 0.0
  %203 = vmatpush1.msra.mxu0 0.0
  %204 = vmatprep.subr.mxu0 0.0
  %205 = vmatpush1.msra.mxu0 0.0
  %206 = vmatprep.subr.mxu0 0.0
  %207 = vmatpush1.msra.mxu0 0.0
  %208 = vmatprep.subr.mxu0 0.0
  %209 = vmatpush1.msra.mxu0 0.0
  %210 = vmatprep.subr.mxu0 0.0
  %211 = vmatpush1.msra.mxu0 0.0
  %212 = vmatprep.subr.mxu0 0.0
  %213 = vmatpush1.msra.mxu0 0.0
  %214 = vmatprep.subr.mxu0 0.0
  %215 = vmatpush1.msra.mxu0 0.0
  %216 = vmatprep.subr.mxu0 0.0
  %217 = vmatpush1.msra.mxu0 0.0
  %218 = vmatprep.mubr.f32.mxu0 0.0
  %219 = vmatmul.mubr.f32.gmra.mrb[0].mxu0 %v134
  %v220 = vpop.f32.mrb[0].mxu0
  %v221 = vadd.f32 0.0, %v220
  %v222 = vpop.f32.mrb[0].mxu0
  %223 = vmatprep.mubr.f32.mxu0 0.0
  %224 = vmatmul.mubr.f32.gmra.mrb[0].mxu0 %v135
  %v225 = vpop.f32.mrb[0].mxu0
  %v226 = vadd.f32 0.0, %v225
  %v227 = vpop.f32.mrb[0].mxu0
  %228 = vdwg.mxu0
  %v229 = vadd.f32 %v136, %v221
  %v230 = vadd.f32 %v137, %v226
  %231 = vst [vmem:[#allocation2] sm:$0xff] %v229
  %232 = vst [vmem:[#allocation2 + $0x8] sm:$0xff] %v230
  // Predicated region
  $region26: #{_mlp_pallas_impl.1} parent=0 // pred_check
    %p233 = pneg %p20
  $region27: #{_mlp_pallas_impl.1} parent=0 // pred_check_branch
    %235 = sbr.rel (%p233) target = $region29
  $region28: #{_mlp_pallas_impl.1} parent=0 // pred_region
    %v236 = vld [vmem:[#allocation2] sm:$0xff]
    %v237 = vld [vmem:[#allocation2 + $0x8] sm:$0xff]
    %v238 = vld [vmem:[%s4] sm:$0x1]
    %v240 = vlaneseq
    %v241 = vshrl.u32 %v240, 7
    %v242 = vsub.s32 0, %v241
    %v243 = vrot.slane %v238, %v242
    %v245 = vadd.f32 %v236, %v243
    %v246 = vadd.f32 %v237, %v243
    %247 = vst [vmem:[%s5] sm:$0xff] %v245
    %248 = vst [vmem:[%s5 + $0x8] sm:$0xff] %v246
  $region29: #{_mlp_pallas_impl.1} parent=0 // pred_fallthru
    _
  // Predicated region
  $region30: #{_mlp_pallas_impl.1} parent=0 // pred_check
    _
  $region31: #{_mlp_pallas_impl.1} parent=0 // pred_check_branch
    %250 = sbr.rel (0) target = $region33
  $region32: #{_mlp_pallas_impl.1} parent=0 // pred_region
    _
  $region33: #{_mlp_pallas_impl.1} parent=0 // pred_fallthru
    _
  // Predicated region
  $region34: #{_mlp_pallas_impl.1} parent=0 // pred_check
    _
  $region35: #{_mlp_pallas_impl.1} parent=0 // pred_check_branch
    %252 = sbr.rel (0) target = $region37
  $region36: #{_mlp_pallas_impl.1} parent=0 // pred_region
    _
  $region37: #{_mlp_pallas_impl.1} parent=0 // pred_fallthru
    _

</llo_original>
